<compile_context>
chip_gen: v5e
topology: v5e:2x2
jax: 0.10.0
libtpu: 0.0.40
codegen_flags: <defaults>
</compile_context>

<pallas_src>
import functools
import math

import jax
import jax.numpy as jnp
from jax import lax
from jax.experimental import pallas as pl
from jax.experimental.pallas import tpu as pltpu


def _round_up(x, m):
    return ((x + m - 1) // m) * m


def _cma_kernel(x1_ref, x2_ref, wq_ref, bq_ref, wkv_ref, bkv_ref, o_ref,
                kv_ref, *, dp, s2_actual):
    cdt = kv_ref.dtype

    # ---- K/V projection: once per (core-split, batch); reused by q tiles ----
    @pl.when(pl.program_id(2) == 0)
    def _():
        kv = jnp.dot(x2_ref[0], wkv_ref[...],
                     preferred_element_type=jnp.float32) + bkv_ref[...]
        kv_ref[...] = kv.astype(cdt)          # (S2p, 2*Dp) in compute dtype

    # ---- Q projection for this tile (scale already folded into Wq / bq) -----
    q = (jnp.dot(x1_ref[0], wq_ref[...],
                 preferred_element_type=jnp.float32)
         + bq_ref[...]).astype(cdt)           # (TQ, Dp)

    k = kv_ref[:, :dp]                        # (S2p, Dp)  lane-aligned slice
    v = kv_ref[:, dp:]                        # (S2p, Dp)

    # Scores: contract last dims directly (no materialized k transpose).
    s = lax.dot_general(q, k,
                        dimension_numbers=(((1,), (1,)), ((), ())),
                        preferred_element_type=jnp.float32)   # (TQ, S2p) f32

    if s.shape[-1] != s2_actual:              # static: mask padded key rows
        col = lax.broadcasted_iota(jnp.int32, s.shape, 1)
        s = jnp.where(col < s2_actual, s, -jnp.inf)

    # Numerically-stable softmax in f32; approximate reciprocal -> EUP slot.
    m = jnp.max(s, axis=-1, keepdims=True)
    p = jnp.exp(s - m)
    denom = jnp.sum(p, axis=-1, keepdims=True)
    attn = (p * pl.reciprocal(denom, approx=True)).astype(cdt)

    out = jnp.dot(attn, v, preferred_element_type=jnp.float32)   # (TQ, Dp)
    o_ref[0] = out.astype(o_ref.dtype)


def cross_modal_attention(x1, x2, params, *, compute_dtype=None, tq=256):
    """x1: (B, S1, D), x2: (B, S2, D).  Returns (B, S1, D) in x1.dtype.

    compute_dtype: dtype used for the MXU matmuls (accumulation stays f32).
                   Defaults to the input dtype; pass jnp.bfloat16 to hit the
                   bf16 MXU peak on v5e/v6e/v7x when the accuracy budget allows.
    tq:            query tile rows.  256 is safe everywhere; 512 is a good
                   choice on v5e/v6e (128 MiB VMEM) for long S1.
    """
    B, S1, D = x1.shape
    B2, S2, D2 = x2.shape
    assert B2 == B and D2 == D
    assert S2 >= 1, "empty key/value sequence would make the softmax NaN"

    out_dtype = x1.dtype
    cdt = jnp.dtype(compute_dtype) if compute_dtype is not None else jnp.dtype(x1.dtype)
    cbytes = cdt.itemsize
    obytes = jnp.dtype(out_dtype).itemsize
    scale = float(D) ** (-0.5)

    # ---- lane/sublane-friendly padded shapes --------------------------------
    sub = 16 if cbytes == 2 else 8            # sublane packing for 16-bit types
    Dp = max(_round_up(D, 128), 128)
    S2p = max(_round_up(S2, 128), 128)        # lane dim of scores / MXU width

    S1r = _round_up(S1, sub)
    if S1r <= tq:
        TQ, S1p, CS = S1r, S1r, 1
    elif B == 1:
        # Split q tiles across a leading parallel axis -> both TCs busy (v7x)
        # while keeping the q-tile axis "arbitrary" for KV-scratch reuse.
        TQ = tq
        S1p = _round_up(S1, 2 * TQ)
        CS = 2
    else:
        TQ = tq
        S1p = _round_up(S1, TQ)
        CS = 1
    NQ = (S1p // TQ) // CS

    # ---- weights: pre-transpose (out,in)->(in,out), fuse K/V, fold scale ----
    def pad2(a):
        if a.shape == (Dp, Dp):
            return a
        return jnp.pad(a, ((0, Dp - a.shape[0]), (0, Dp - a.shape[1])))

    wq_t = pad2((params["wq"].T * scale).astype(cdt))               # (Dp, Dp)
    wkv_t = jnp.concatenate(
        [pad2(params["wk"].T.astype(cdt)),
         pad2(params["wv"].T.astype(cdt))], axis=1)                 # (Dp, 2Dp)

    def pad_bias(b):
        b = b.astype(jnp.float32)
        return b if b.shape[0] == Dp else jnp.pad(b, (0, Dp - b.shape[0]))

    bq = pad_bias(params["bq"].astype(jnp.float32) * scale).reshape(1, Dp)
    bkv = jnp.concatenate([pad_bias(params["bk"]),
                           pad_bias(params["bv"])]).reshape(1, 2 * Dp)

    # Zero-padding D is exact (padded q/k/v columns are zero); padded key rows
    # are masked with -inf in the kernel; padded query rows are sliced off.
    def prep_x(x, Sp):
        x = x.astype(cdt)
        if Sp != x.shape[1] or Dp != x.shape[2]:
            x = jnp.pad(x, ((0, 0), (0, Sp - x.shape[1]), (0, Dp - x.shape[2])))
        return x

    x1p = prep_x(x1, S1p)
    x2p = prep_x(x2, S2p)

    # ---- specs ---------------------------------------------------------------
    const = pl.Buffered(1)                    # grid-invariant inputs: 1 buffer
    grid = (CS, B, NQ)
    in_specs = [
        pl.BlockSpec((1, TQ, Dp), lambda cs, b, q: (b, cs * NQ + q, 0)),   # x1
        pl.BlockSpec((1, S2p, Dp), lambda cs, b, q: (b, 0, 0),
                     pipeline_mode=const),                                 # x2
        pl.BlockSpec((Dp, Dp), lambda cs, b, q: (0, 0),
                     pipeline_mode=const),                                 # Wq^T
        pl.BlockSpec((1, Dp), lambda cs, b, q: (0, 0),
                     pipeline_mode=const),                                 # bq
        pl.BlockSpec((Dp, 2 * Dp), lambda cs, b, q: (0, 0),
                     pipeline_mode=const),                                 # [Wk^T|Wv^T]
        pl.BlockSpec((1, 2 * Dp), lambda cs, b, q: (0, 0),
                     pipeline_mode=const),                                 # [bk|bv]
    ]
    out_spec = pl.BlockSpec((1, TQ, Dp), lambda cs, b, q: (b, cs * NQ + q, 0))

    # ---- VMEM budget: blocks + scratch + in-kernel temporaries + headroom ----
    vmem_need = (
        2 * TQ * Dp * cbytes                  # x1 tile (double-buffered)
        + S2p * Dp * cbytes                   # x2 (single-buffered)
        + 3 * Dp * Dp * cbytes                # Wq^T + [Wk^T|Wv^T]
        + 3 * Dp * 4                          # biases (f32)
        + 2 * TQ * Dp * obytes                # output tile (double-buffered)
        + S2p * 2 * Dp * cbytes               # KV scratch
        + S2p * 2 * Dp * 4                    # transient f32 kv before cast
        + TQ * Dp * 8                         # f32 q + f32 out temporaries
        + TQ * S2p * (8 + cbytes)             # f32 scores + probs + cdt attn
    )
    vmem_limit = int(vmem_need * 1.5) + (4 << 20)
    try:
        cap = int(pltpu.get_tpu_info().vmem_capacity_bytes * 0.9)
    except Exception:                          # pragma: no cover
        cap = 64 << 20                         # conservative: fits every chip
    vmem_limit = min(max(vmem_limit, 32 << 20), cap)

    kernel = functools.partial(_cma_kernel, dp=Dp, s2_actual=S2)

    # TODO(synk): for very long S2 (where the (S2p, 2*Dp) KV scratch no longer
    # fits v7x VMEM) switch to a flash-style online softmax over S2 tiles with
    # m/l/acc scratch, and for D >= 1024 tile the weight matmuls over a
    # contraction grid axis with a VMEM accumulator.
    out_p = pl.pallas_call(
        kernel,
        out_shape=jax.ShapeDtypeStruct((B, S1p, Dp), out_dtype),
        grid_spec=pltpu.PrefetchScalarGridSpec(
            num_scalar_prefetch=0,
            grid=grid,
            in_specs=in_specs,
            out_specs=out_spec,
            scratch_shapes=[pltpu.VMEM((S2p, 2 * Dp), cdt)],
        ),
        compiler_params=pltpu.CompilerParams(
            dimension_semantics=("parallel", "parallel", "arbitrary"),
            vmem_limit_bytes=vmem_limit),
    )(x1p, x2p, wq_t, bq, wkv_t, bkv)

    return out_p[:, :S1, :D]


def init_params(key, dim, dtype=jnp.float32):
    """Deterministic init matching nn.Linear shapes: W (out,in), b (out,)."""
    ks = jax.random.split(key, 6)
    bound = 1.0 / math.sqrt(dim)

    def u(k, shape):
        return jax.random.uniform(k, shape, dtype, minval=-bound, maxval=bound)

    return {
        "wq": u(ks[0], (dim, dim)), "bq": u(ks[1], (dim,)),
        "wk": u(ks[2], (dim, dim)), "bk": u(ks[3], (dim,)),
        "wv": u(ks[4], (dim, dim)), "bv": u(ks[5], (dim,)),
    }


def reference(x1, x2, params):
    """Pure-JAX reference mirroring the PyTorch forward, for verification."""
    D = x1.shape[-1]
    q = x1 @ params["wq"].T + params["bq"]
    k = x2 @ params["wk"].T + params["bk"]
    v = x2 @ params["wv"].T + params["bv"]
    attn = (q @ jnp.swapaxes(k, -2, -1)) * (D ** -0.5)
    attn = jax.nn.softmax(attn, axis=-1)
    return attn @ v


if __name__ == "__main__":
    key = jax.random.PRNGKey(0)
    k_p, k_x1, k_x2 = jax.random.split(key, 3)

    # ---- small test (matches the module's expected usage) -------------------
    B, S1, S2, D = 2, 8, 8, 32
    params = init_params(k_p, D)
    x1 = jax.random.normal(k_x1, (B, S1, D), jnp.float32)
    x2 = jax.random.normal(k_x2, (B, S2, D), jnp.float32)
    ref = reference(x1, x2, params)

    # f32 compute path (only approximation: EUP approx reciprocal ~1e-3 rel).
    out = jax.block_until_ready(cross_modal_attention(x1, x2, params))
    assert out.shape == (B, S1, D)
    diff = float(jnp.max(jnp.abs(out - ref)))
    assert jnp.allclose(out, ref, atol=2e-3, rtol=2e-3), (
        f"f32 path mismatch vs reference: max abs diff {diff}")

    # bf16 MXU path (activations/weights cast to bf16, f32 accumulation).
    out_bf = jax.block_until_ready(
        cross_modal_attention(x1, x2, params, compute_dtype=jnp.bfloat16))
    diff_bf = float(jnp.max(jnp.abs(out_bf - ref)))
    assert jnp.allclose(out_bf, ref, atol=5e-2, rtol=5e-2), (
        f"bf16 path mismatch vs reference: max abs diff {diff_bf}")

    # ---- multi-q-tile / B==1 core-split / padded-D / padded-S2 path ---------
    k_p2, k_a, k_b = jax.random.split(jax.random.PRNGKey(1), 3)
    B2, S1b, S2b, Db = 1, 520, 70, 48
    params2 = init_params(k_p2, Db)
    xa = jax.random.normal(k_a, (B2, S1b, Db), jnp.float32)
    xb = jax.random.normal(k_b, (B2, S2b, Db), jnp.float32)
    out2 = jax.block_until_ready(cross_modal_attention(xa, xb, params2))
    ref2 = reference(xa, xb, params2)
    diff2 = float(jnp.max(jnp.abs(out2 - ref2)))
    assert out2.shape == (B2, S1b, Db)
    assert jnp.allclose(out2, ref2, atol=2e-3, rtol=2e-3), (
        f"multi-tile path mismatch vs reference: max abs diff {diff2}")

    print("KERNEL_OK")
</pallas_src>

<mosaic_0001>
module attributes {stable_mosaic.version = 11 : i64} {
  func.func @_cma_kernel(%arg0: i32, %arg1: i32, %arg2: i32, %arg3: memref<1x8x128xf32, #tpu.memory_space<vmem>>, %arg4: memref<1x128x128xf32, #tpu.memory_space<vmem>>, %arg5: memref<128x128xf32, #tpu.memory_space<vmem>>, %arg6: memref<1x128xf32, #tpu.memory_space<vmem>>, %arg7: memref<128x256xf32, #tpu.memory_space<vmem>>, %arg8: memref<1x256xf32, #tpu.memory_space<vmem>>, %arg9: memref<1x8x128xf32, #tpu.memory_space<vmem>>, %arg10: memref<128x256xf32, #tpu.memory_space<vmem>>) attributes {dimension_semantics = [#tpu.dimension_semantics<parallel>, #tpu.dimension_semantics<parallel>, #tpu.dimension_semantics<arbitrary>], iteration_bounds = array<i64: 1, 2, 1>, scalar_prefetch = 0 : i64, scratch_operands = 1 : i64, tpu.core_type = #tpu.core_type<tc>, window_params = [{transform_indices = @transform_0, window_bounds = array<i64: 1, 8, 128>}, {pipeline_mode = #tpu.pipeline_mode<synchronous>, transform_indices = @transform_1, window_bounds = array<i64: 1, 128, 128>}, {pipeline_mode = #tpu.pipeline_mode<synchronous>, transform_indices = @transform_2, window_bounds = array<i64: 128, 128>}, {pipeline_mode = #tpu.pipeline_mode<synchronous>, transform_indices = @transform_3, window_bounds = array<i64: 1, 128>}, {pipeline_mode = #tpu.pipeline_mode<synchronous>, transform_indices = @transform_4, window_bounds = array<i64: 128, 256>}, {pipeline_mode = #tpu.pipeline_mode<synchronous>, transform_indices = @transform_5, window_bounds = array<i64: 1, 256>}, {transform_indices = @transform_6, window_bounds = array<i64: 1, 8, 128>}]} {
    %c0_i32 = arith.constant 0 : i32
    %0 = arith.cmpi eq, %arg2, %c0_i32 : i32
    %1 = arith.extui %0 : i1 to i32
    %c0_i32_0 = arith.constant 0 : i32
    %2 = arith.cmpi ne, %1, %c0_i32_0 : i32
    scf.if %2 {
      %c0_18 = arith.constant 0 : index
      %c0_19 = arith.constant 0 : index
      %c0_20 = arith.constant 0 : index
      %32 = vector.load %arg4[%c0_18, %c0_19, %c0_20] : memref<1x128x128xf32, #tpu.memory_space<vmem>>, vector<1x128x128xf32>
      %33 = vector.shape_cast %32 : vector<1x128x128xf32> to vector<128x128xf32>
      %c0_21 = arith.constant 0 : index
      %c0_22 = arith.constant 0 : index
      %34 = vector.load %arg7[%c0_21, %c0_22] : memref<128x256xf32, #tpu.memory_space<vmem>>, vector<128x256xf32>
      %cst_23 = arith.constant dense<0.000000e+00> : vector<128x256xf32>
      %35 = tpu.matmul %33, %34, %cst_23 {dimension_numbers = #tpu.dot_dimension_numbers<[1], [0], [0], [1], [0, 0, 1, 1], [], []>} : vector<128x128xf32>, vector<128x256xf32>, vector<128x256xf32> -> vector<128x256xf32>
      %c0_24 = arith.constant 0 : index
      %c0_25 = arith.constant 0 : index
      %36 = vector.load %arg8[%c0_24, %c0_25] : memref<1x256xf32, #tpu.memory_space<vmem>>, vector<1x256xf32>
      %37 = vector.broadcast %36 : vector<1x256xf32> to vector<128x256xf32>
      %38 = arith.addf %35, %37 : vector<128x256xf32>
      %c0_26 = arith.constant 0 : index
      %c0_27 = arith.constant 0 : index
      %39 = vector.load %arg10[%c0_26, %c0_27] : memref<128x256xf32, #tpu.memory_space<vmem>>, vector<128x256xf32>
      tpu.vector_store %arg10[%c0_26, %c0_27], %38 {strides = array<i32>} : memref<128x256xf32, #tpu.memory_space<vmem>>, vector<128x256xf32>,
    } else {
    }
    %c0 = arith.constant 0 : index
    %c0_1 = arith.constant 0 : index
    %c0_2 = arith.constant 0 : index
    %3 = vector.load %arg3[%c0, %c0_1, %c0_2] : memref<1x8x128xf32, #tpu.memory_space<vmem>>, vector<1x8x128xf32>
    %4 = vector.shape_cast %3 : vector<1x8x128xf32> to vector<8x128xf32>
    %c0_3 = arith.constant 0 : index
    %c0_4 = arith.constant 0 : index
    %5 = vector.load %arg5[%c0_3, %c0_4] : memref<128x128xf32, #tpu.memory_space<vmem>>, vector<128x128xf32>
    %cst = arith.constant dense<0.000000e+00> : vector<8x128xf32>
    %6 = tpu.matmul %4, %5, %cst {dimension_numbers = #tpu.dot_dimension_numbers<[1], [0], [0], [1], [0, 0, 1, 1], [], []>} : vector<8x128xf32>, vector<128x128xf32>, vector<8x128xf32> -> vector<8x128xf32>
    %c0_5 = arith.constant 0 : index
    %c0_6 = arith.constant 0 : index
    %7 = vector.load %arg6[%c0_5, %c0_6] : memref<1x128xf32, #tpu.memory_space<vmem>>, vector<1x128xf32>
    %8 = vector.broadcast %7 : vector<1x128xf32> to vector<8x128xf32>
    %9 = arith.addf %6, %8 : vector<8x128xf32>
    %c0_7 = arith.constant 0 : index
    %c0_8 = arith.constant 0 : index
    %10 = vector.load %arg10[%c0_7, %c0_8] : memref<128x256xf32, #tpu.memory_space<vmem>>, vector<128x128xf32>
    %c0_9 = arith.constant 0 : index
    %c128 = arith.constant 128 : index
    %11 = vector.load %arg10[%c0_9, %c128] : memref<128x256xf32, #tpu.memory_space<vmem>>, vector<128x128xf32>
    %cst_10 = arith.constant dense<0.000000e+00> : vector<8x128xf32>
    %12 = tpu.matmul %9, %10, %cst_10 {dimension_numbers = #tpu.dot_dimension_numbers<[1], [1], [0], [0], [0, 0, 1, 0], [], []>} : vector<8x128xf32>, vector<128x128xf32>, vector<8x128xf32> -> vector<8x128xf32>
    %13 = tpu.iota {dimensions = array<i32: 1>} : vector<8x128xi32>
    %c8_i32 = arith.constant 8 : i32
    %14 = vector.broadcast %c8_i32 : i32 to vector<8x128xi32>
    %15 = arith.cmpi slt, %13, %14 : vector<8x128xi32>
    %cst_11 = arith.constant 0xFF800000 : f32
    %16 = vector.broadcast %cst_11 : f32 to vector<8x128xf32>
    %17 = arith.select %15, %12, %16 : vector<8x128xi1>, vector<8x128xf32>
    %cst_12 = arith.constant dense<0xFF800000> : vector<8xf32>
    %18 = vector.multi_reduction <maximumf>, %17, %cst_12 [1] : vector<8x128xf32> to vector<8xf32>
    %19 = vector.shape_cast %18 : vector<8xf32> to vector<8x1xf32>
    %20 = vector.broadcast %19 : vector<8x1xf32> to vector<8x128xf32>
    %21 = arith.subf %17, %20 : vector<8x128xf32>
    %22 = math.exp %21 : vector<8x128xf32>
    %cst_13 = arith.constant dense<0.000000e+00> : vector<8xf32>
    %23 = vector.multi_reduction <add>, %22, %cst_13 [1] : vector<8x128xf32> to vector<8xf32>
    %24 = vector.shape_cast %23 : vector<8xf32> to vector<8x1xf32>
    %25 = tpu.reciprocal %24 {approx = true} : vector<8x1xf32> -> vector<8x1xf32>
    %26 = vector.broadcast %25 : vector<8x1xf32> to vector<8x128xf32>
    %27 = arith.mulf %22, %26 : vector<8x128xf32>
    %cst_14 = arith.constant dense<0.000000e+00> : vector<8x128xf32>
    %28 = tpu.matmul %27, %11, %cst_14 {dimension_numbers = #tpu.dot_dimension_numbers<[1], [0], [0], [1], [0, 0, 1, 1], [], []>} : vector<8x128xf32>, vector<128x128xf32>, vector<8x128xf32> -> vector<8x128xf32>
    %c0_15 = arith.constant 0 : index
    %c0_16 = arith.constant 0 : index
    %c0_17 = arith.constant 0 : index
    %29 = vector.load %arg9[%c0_15, %c0_16, %c0_17] : memref<1x8x128xf32, #tpu.memory_space<vmem>>, vector<1x8x128xf32>
    %30 = vector.shape_cast %29 : vector<1x8x128xf32> to vector<8x128xf32>
    %31 = vector.shape_cast %28 : vector<8x128xf32> to vector<1x8x128xf32>
    tpu.vector_store %arg9[%c0_15, %c0_16, %c0_17], %31 {strides = array<i32>} : memref<1x8x128xf32, #tpu.memory_space<vmem>>, vector<1x8x128xf32>,
    return
  }
  func.func @transform_0(%arg0: i32, %arg1: i32, %arg2: i32) -> (i32, i32, i32) {
    %c1_i32 = arith.constant 1 : i32
    %0 = arith.muli %arg0, %c1_i32 : i32
    %1 = arith.addi %0, %arg2 : i32
    %c0_i32 = arith.constant 0 : i32
    %c0_i32_0 = arith.constant 0 : i32
    return %arg1, %1, %c0_i32 : i32, i32, i32
  }
  func.func @transform_1(%arg0: i32, %arg1: i32, %arg2: i32) -> (i32, i32, i32) {
    %c0_i32 = arith.constant 0 : i32
    %c0_i32_0 = arith.constant 0 : i32
    %c0_i32_1 = arith.constant 0 : i32
    return %arg1, %c0_i32, %c0_i32_0 : i32, i32, i32
  }
  func.func @transform_2(%arg0: i32, %arg1: i32, %arg2: i32) -> (i32, i32) {
    %c0_i32 = arith.constant 0 : i32
    %c0_i32_0 = arith.constant 0 : i32
    %c0_i32_1 = arith.constant 0 : i32
    return %c0_i32, %c0_i32_0 : i32, i32
  }
  func.func @transform_3(%arg0: i32, %arg1: i32, %arg2: i32) -> (i32, i32) {
    %c0_i32 = arith.constant 0 : i32
    %c0_i32_0 = arith.constant 0 : i32
    %c0_i32_1 = arith.constant 0 : i32
    return %c0_i32, %c0_i32_0 : i32, i32
  }
  func.func @transform_4(%arg0: i32, %arg1: i32, %arg2: i32) -> (i32, i32) {
    %c0_i32 = arith.constant 0 : i32
    %c0_i32_0 = arith.constant 0 : i32
    %c0_i32_1 = arith.constant 0 : i32
    return %c0_i32, %c0_i32_0 : i32, i32
  }
  func.func @transform_5(%arg0: i32, %arg1: i32, %arg2: i32) -> (i32, i32) {
    %c0_i32 = arith.constant 0 : i32
    %c0_i32_0 = arith.constant 0 : i32
    %c0_i32_1 = arith.constant 0 : i32
    return %c0_i32, %c0_i32_0 : i32, i32
  }
  func.func @transform_6(%arg0: i32, %arg1: i32, %arg2: i32) -> (i32, i32, i32) {
    %c1_i32 = arith.constant 1 : i32
    %0 = arith.muli %arg0, %c1_i32 : i32
    %1 = arith.addi %0, %arg2 : i32
    %c0_i32 = arith.constant 0 : i32
    %c0_i32_0 = arith.constant 0 : i32
    return %arg1, %1, %c0_i32 : i32, i32, i32
  }
}

</mosaic_0001>

<llo_original>
// kernel: tpu_custom_call.1
$region0: #{tpu_custom_call.1}
  #allocation0 [shape = 'u32[]', space=smem, size = 0x4, offset = 0x4, fixed_abs, tag = 'smem constant byte address 0x4 - core index']
  #allocation1 [shape = 'u32[72,128]{1,0:T(1,128)}', space=vmem, size = 0x9000, scoped, tag = 'internal scratch']
  #allocation2 [shape = 'f32[128,256]{1,0:T(8,128)}', space=vmem, size = 0x20000, scoped, tag = 'scratch operand']
  %s0 = inlined_call_operand.hbm [shape: f32[2,8,128], index: 0, kind: input, shape index: {}]
  %s1 = inlined_call_operand.hbm [shape: f32[2,128,128], index: 1, kind: input, shape index: {}]
  %s2 = inlined_call_operand.hbm [shape: f32[128,128], index: 2, kind: input, shape index: {}]
  %s3 = inlined_call_operand.vmem [shape: f32[1,128], index: 3, kind: input, shape index: {}]
  %s4 = inlined_call_operand.hbm [shape: f32[128,256], index: 4, kind: input, shape index: {}]
  %s5 = inlined_call_operand.vmem [shape: f32[1,256], index: 5, kind: input, shape index: {}]
  %s6 = inlined_call_operand.hbm [shape: f32[2,8,128], index: 6, kind: output, shape index: {}]
  %s7 = sld [smem:[#allocation0]]
  $region77: #{tpu_custom_call.1} parent=0
    _
  %s9 = ssub.s32 1, %s7
  %s10 = scalar_select 0, %s9, %s7
  $region1: #{tpu_custom_call.1} parent=0
    #allocation3 [shape = 'u8[8192]{0}', space=vmem, size = 0x2000, scoped, tag = 'input window, operand 0']
    #allocation4 [shape = 's32[2]{0}', space=sflag, size = 0x8, scoped, tag = 'scoped memory for tpu_custom_call.1']
    #allocation5 [shape = 's32[2]{0}', space=sflag, size = 0x8, scoped, tag = 'scoped memory for tpu_custom_call.1']
    #allocation6 [shape = 'u8[65536]{0}', space=vmem, size = 0x10000, scoped, tag = 'input window, operand 1, single buffered']
    #allocation7 [shape = 's32[1]{0}', space=sflag, size = 0x4, scoped, tag = 'scoped memory for tpu_custom_call.1']
    #allocation8 [shape = 'u8[65536]{0}', space=vmem, size = 0x10000, scoped, tag = 'input window, operand 2, single buffered']
    #allocation9 [shape = 'u8[131072]{0}', space=vmem, size = 0x20000, scoped, tag = 'input window, operand 4, single buffered']
    #allocation10 [shape = 's32[1]{0}', space=sflag, size = 0x4, scoped, tag = 'scoped memory for tpu_custom_call.1']
    #allocation11 [shape = 'u8[8192]{0}', space=vmem, size = 0x2000, scoped, tag = 'output window, operand 0']
    %11 = vsyncpa [#allocation4], 0
    %s12 = scalar_lea.sflag [#allocation4], 1
    %13 = vsyncpa %s12, 0
    %14 = vsyncpa [#allocation7], 0
    %15 = vsyncpa [#allocation10], 0
    %16 = vsyncpa [#allocation5], 0
    %s17 = scalar_lea.sflag [#allocation5], 1
    %18 = vsyncpa %s17, 0
    loop: start=0, step=1, limit=4
    $region2: #{tpu_custom_call.1} parent=1 // loop_pre_header
      _
    $region3: #{tpu_custom_call.1} parent=1 // loop_header
      %s20 = sphi 0, %s24
      %p21 = scmp.ge.s32.totalorder %s20, 4
      %s27 = sphi 0, %s46
      %s28 = sphi 0, %s42
      %s29 = sphi 0, %s38
      %s30 = sphi 0, %s27
      %s31 = sphi 0, %s28
      %s32 = sphi 0, %s29
      %s33 = sphi 0, %s30
      %s34 = sphi 0, %s31
      %s35 = sphi 0, %s32
      %s53 = sphi 0, %s55
      %s56 = sphi 0, %s53
      %s57 = sphi 0, %s56
      %s73 = sphi 0, %s57
      %s79 = sphi 0, %s81
      %s82 = sphi 0, %s79
      %s83 = sphi 0, %s82
      %s99 = sphi 0, %s83
      %s103 = sphi 0, %s103
      %s105 = sphi 0, %s103
      %s106 = sphi 0, %s105
      %s120 = sphi 0, %s106
      %s124 = sphi 0, %s124
      %s126 = sphi 0, %s124
      %s127 = sphi 0, %s126
      %s141 = sphi 0, %s127
      %s145 = sphi 0, %s145
      %s147 = sphi 0, %s145
      %s148 = sphi 0, %s147
      %s162 = sphi 0, %s148
      %s166 = sphi 0, %s166
      %s168 = sphi 0, %s166
      %s169 = sphi 0, %s168
      %s183 = sphi 0, %s169
      %s193 = sphi 0, %s195
      %s196 = sphi 0, %s193
      %s197 = sphi 0, %s196
      %s213 = sphi 0, %s197
    $region4: #{tpu_custom_call.1} parent=1 // loop_header_branch
      %23 = sbr.rel (%p21) target = $region8
    $region5: #{tpu_custom_call.1} parent=1 // loop_body
      %s25 = ssub.s32 %s20, 1
      %s26 = ssub.s32 %s20, 2
      %s36 = sadd.s32 1, %s29
      %p37 = scmp.ge.s32.totalorder %s36, 1
      %s38 = scalar_select %p37, 0, %s36
      %s39 = sadd.s32 1, %s28
      %s40 = scalar_select %p37, %s39, %s28
      %p41 = scmp.ge.s32.totalorder %s40, 2
      %s42 = scalar_select %p41, 0, %s40
      %s43 = sadd.s32 1, %s27
      %s44 = scalar_select %p41, %s43, %s27
      %p45 = scmp.ge.s32.totalorder %s44, 1
      %s46 = scalar_select %p45, 0, %s44
      %s47 = sadd.s32 %s27, %s29
      %s48 = sadd.s32 %s46, %s38
      %s49 = ssub.s32 %s28, %s42
      %s50 = ssub.s32 %s47, %s48
      %s51 = sor.u32 %s49, %s50
      %p52 = scmp.eq.s32.totalorder %s51, 0
      %s54 = sadd.s32 %s53, 1
      %s55 = scalar_select %p52, %s53, %s54
      %p58 = pneg %p52
      %p59 = scmp.eq.s32.totalorder %s20, 1
      %p60 = por %p58, %p59
      %p61 = scmp.ne.s32.totalorder %s53, %s56
      %p62 = scmp.eq.s32.totalorder %s20, 0
      %p63 = por %p61, %p62
      %p64 = scmp.ne.s32.totalorder %s53, %s56
      %p65 = scmp.eq.s32.totalorder %s25, 1
      %p66 = por %p64, %p65
      %p67 = scmp.ne.s32.totalorder %s56, %s57
      %p68 = scmp.eq.s32.totalorder %s25, 0
      %p69 = por %p67, %p68
      %p70 = scmp.ne.s32.totalorder %s56, %s57
      %p71 = scmp.eq.s32.totalorder %s26, 1
      %p72 = por %p70, %p71
      %p74 = scmp.ne.s32.totalorder %s57, %s73
      %p75 = scmp.eq.s32.totalorder %s26, 0
      %p76 = por %p74, %p75
      %s77 = ssub.s32 %s28, %s42
      %p78 = scmp.eq.s32.totalorder %s77, 0
      %s80 = sadd.s32 %s79, 1
      %s81 = scalar_select %p78, %s79, %s80
      %p84 = pneg %p78
      %p85 = scmp.eq.s32.totalorder %s20, 1
      %p86 = por %p84, %p85
      %p87 = scmp.ne.s32.totalorder %s79, %s82
      %p88 = scmp.eq.s32.totalorder %s20, 0
      %p89 = por %p87, %p88
      %p90 = scmp.ne.s32.totalorder %s79, %s82
      %p91 = scmp.eq.s32.totalorder %s25, 1
      %p92 = por %p90, %p91
      %p93 = scmp.ne.s32.totalorder %s82, %s83
      %p94 = scmp.eq.s32.totalorder %s25, 0
      %p95 = por %p93, %p94
      %p96 = scmp.ne.s32.totalorder %s82, %s83
      %p97 = scmp.eq.s32.totalorder %s26, 1
      %p98 = por %p96, %p97
      %p100 = scmp.ne.s32.totalorder %s83, %s99
      %p101 = scmp.eq.s32.totalorder %s26, 0
      %p102 = por %p100, %p101
      %s104 = sadd.s32 %s103, 1
      %p107 = scmp.eq.s32.totalorder %s20, 1
      %p108 = scmp.ne.s32.totalorder %s103, %s105
      %p109 = scmp.eq.s32.totalorder %s20, 0
      %p110 = por %p108, %p109
      %p111 = scmp.ne.s32.totalorder %s103, %s105
      %p112 = scmp.eq.s32.totalorder %s25, 1
      %p113 = por %p111, %p112
      %p114 = scmp.ne.s32.totalorder %s105, %s106
      %p115 = scmp.eq.s32.totalorder %s25, 0
      %p116 = por %p114, %p115
      %p117 = scmp.ne.s32.totalorder %s105, %s106
      %p118 = scmp.eq.s32.totalorder %s26, 1
      %p119 = por %p117, %p118
      %p121 = scmp.ne.s32.totalorder %s106, %s120
      %p122 = scmp.eq.s32.totalorder %s26, 0
      %p123 = por %p121, %p122
      %s125 = sadd.s32 %s124, 1
      %p128 = scmp.eq.s32.totalorder %s20, 1
      %p129 = scmp.ne.s32.totalorder %s124, %s126
      %p130 = scmp.eq.s32.totalorder %s20, 0
      %p131 = por %p129, %p130
      %p132 = scmp.ne.s32.totalorder %s124, %s126
      %p133 = scmp.eq.s32.totalorder %s25, 1
      %p134 = por %p132, %p133
      %p135 = scmp.ne.s32.totalorder %s126, %s127
      %p136 = scmp.eq.s32.totalorder %s25, 0
      %p137 = por %p135, %p136
      %p138 = scmp.ne.s32.totalorder %s126, %s127
      %p139 = scmp.eq.s32.totalorder %s26, 1
      %p140 = por %p138, %p139
      %p142 = scmp.ne.s32.totalorder %s127, %s141
      %p143 = scmp.eq.s32.totalorder %s26, 0
      %p144 = por %p142, %p143
      %s146 = sadd.s32 %s145, 1
      %p149 = scmp.eq.s32.totalorder %s20, 1
      %p150 = scmp.ne.s32.totalorder %s145, %s147
      %p151 = scmp.eq.s32.totalorder %s20, 0
      %p152 = por %p150, %p151
      %p153 = scmp.ne.s32.totalorder %s145, %s147
      %p154 = scmp.eq.s32.totalorder %s25, 1
      %p155 = por %p153, %p154
      %p156 = scmp.ne.s32.totalorder %s147, %s148
      %p157 = scmp.eq.s32.totalorder %s25, 0
      %p158 = por %p156, %p157
      %p159 = scmp.ne.s32.totalorder %s147, %s148
      %p160 = scmp.eq.s32.totalorder %s26, 1
      %p161 = por %p159, %p160
      %p163 = scmp.ne.s32.totalorder %s148, %s162
      %p164 = scmp.eq.s32.totalorder %s26, 0
      %p165 = por %p163, %p164
      %s167 = sadd.s32 %s166, 1
      %p170 = scmp.eq.s32.totalorder %s20, 1
      %p171 = scmp.ne.s32.totalorder %s166, %s168
      %p172 = scmp.eq.s32.totalorder %s20, 0
      %p173 = por %p171, %p172
      %p174 = scmp.ne.s32.totalorder %s166, %s168
      %p175 = scmp.eq.s32.totalorder %s25, 1
      %p176 = por %p174, %p175
      %p177 = scmp.ne.s32.totalorder %s168, %s169
      %p178 = scmp.eq.s32.totalorder %s25, 0
      %p179 = por %p177, %p178
      %p180 = scmp.ne.s32.totalorder %s168, %s169
      %p181 = scmp.eq.s32.totalorder %s26, 1
      %p182 = por %p180, %p181
      %p184 = scmp.ne.s32.totalorder %s169, %s183
      %p185 = scmp.eq.s32.totalorder %s26, 0
      %p186 = por %p184, %p185
      %s187 = sadd.s32 %s27, %s29
      %s188 = sadd.s32 %s46, %s38
      %s189 = ssub.s32 %s28, %s42
      %s190 = ssub.s32 %s187, %s188
      %s191 = sor.u32 %s189, %s190
      %p192 = scmp.eq.s32.totalorder %s191, 0
      %s194 = sadd.s32 %s193, 1
      %s195 = scalar_select %p192, %s193, %s194
      %p198 = pneg %p192
      %p199 = scmp.eq.s32.totalorder %s20, 1
      %p200 = por %p198, %p199
      %p201 = scmp.ne.s32.totalorder %s193, %s196
      %p202 = scmp.eq.s32.totalorder %s20, 0
      %p203 = por %p201, %p202
      %p204 = scmp.ne.s32.totalorder %s193, %s196
      %p205 = scmp.eq.s32.totalorder %s25, 1
      %p206 = por %p204, %p205
      %p207 = scmp.ne.s32.totalorder %s196, %s197
      %p208 = scmp.eq.s32.totalorder %s25, 0
      %p209 = por %p207, %p208
      %p210 = scmp.ne.s32.totalorder %s196, %s197
      %p211 = scmp.eq.s32.totalorder %s26, 1
      %p212 = por %p210, %p211
      %p214 = scmp.ne.s32.totalorder %s197, %s213
      %p215 = scmp.eq.s32.totalorder %s26, 0
      %p216 = por %p214, %p215
      %p217 = scmp.le.s32.totalorder 1, %s20
      %p218 = scmp.lt.s32.totalorder %s20, 3
      %p219 = pnand %p217, %p218
      %p220 = pneg %p219
      // Predicated region
      $region9: #{tpu_custom_call.1} parent=5 // pred_check
        _
      $region10: #{tpu_custom_call.1} parent=5 // pred_check_branch
        %222 = sbr.rel (%p219) target = $region12
      $region11: #{tpu_custom_call.1} parent=5 // pred_region
        %s223 = ssub.s32 %s20, 1
        // Predicated region
        $region13: #{tpu_custom_call.1} parent=11 // pred_check
          %p224 = pneg %p95
        $region14: #{tpu_custom_call.1} parent=11 // pred_check_branch
          %226 = sbr.rel (%p224) target = $region16
        $region15: #{tpu_custom_call.1} parent=11 // pred_region
          %228 = vsyncadd [#allocation7], 0
          %s229 = smul.addr %s31, 16
          %s230 = smul.addr %s229, 8
          %s231 = scalar_lea.hbm %s1, %s230
          %s232 = sshll.u32 %s231, 4
          %s233 = int_to_ptr.hbm [resolvable:$true] %s232
          %s234 = sshll.u32 [#allocation6], 4
          %s235 = int_to_ptr.vmem [resolvable:$true] %s234
          %240 = dma.hbm_to_vmem [thread:$0]  %s233, 2048, %s235, [#allocation7], 128, 128, 8
        $region16: #{tpu_custom_call.1} parent=11 // pred_fallthru
          _
        // Predicated region
        $region17: #{tpu_custom_call.1} parent=11 // pred_check
          %p241 = pneg %p116
        $region18: #{tpu_custom_call.1} parent=11 // pred_check_branch
          %243 = sbr.rel (%p241) target = $region20
        $region19: #{tpu_custom_call.1} parent=11 // pred_region
          %245 = vsyncadd [#allocation7], 0
          %s246 = sshll.u32 %s2, 4
          %s247 = int_to_ptr.hbm [resolvable:$true] %s246
          %s248 = sshll.u32 [#allocation8], 4
          %s249 = int_to_ptr.vmem [resolvable:$true] %s248
          %254 = dma.hbm_to_vmem [thread:$0]  %s247, 2048, %s249, [#allocation7], 128, 128, 8
        $region20: #{tpu_custom_call.1} parent=11 // pred_fallthru
          _
        // Predicated region
        $region21: #{tpu_custom_call.1} parent=11 // pred_check
          %p255 = pneg %p137
        $region22: #{tpu_custom_call.1} parent=11 // pred_check_branch
          %257 = sbr.rel (%p255) target = $region24
        $region23: #{tpu_custom_call.1} parent=11 // pred_region
          _
        $region24: #{tpu_custom_call.1} parent=11 // pred_fallthru
          _
        // Predicated region
        $region25: #{tpu_custom_call.1} parent=11 // pred_check
          %p258 = pneg %p158
        $region26: #{tpu_custom_call.1} parent=11 // pred_check_branch
          %260 = sbr.rel (%p258) target = $region28
        $region27: #{tpu_custom_call.1} parent=11 // pred_region
          %262 = vsyncadd [#allocation10], 0
          %s263 = sshll.u32 %s4, 4
          %s264 = int_to_ptr.hbm [resolvable:$true] %s263
          %s265 = sshll.u32 [#allocation9], 4
          %s266 = int_to_ptr.vmem [resolvable:$true] %s265
          %271 = dma.hbm_to_vmem [thread:$0]  %s264, 4096, %s266, [#allocation10], 256, 256, 16
        $region28: #{tpu_custom_call.1} parent=11 // pred_fallthru
          _
        // Predicated region
        $region29: #{tpu_custom_call.1} parent=11 // pred_check
          %p272 = pneg %p179
        $region30: #{tpu_custom_call.1} parent=11 // pred_check_branch
          %274 = sbr.rel (%p272) target = $region32
        $region31: #{tpu_custom_call.1} parent=11 // pred_region
          _
        $region32: #{tpu_custom_call.1} parent=11 // pred_fallthru
          _
      $region12: #{tpu_custom_call.1} parent=5 // pred_fallthru
        _
      %p275 = scmp.lt.s32.totalorder %s20, 2
      // Predicated region
      $region33: #{tpu_custom_call.1} parent=5 // pred_check
        %p276 = pneg %p275
      $region34: #{tpu_custom_call.1} parent=5 // pred_check_branch
        %278 = sbr.rel (%p276) target = $region36
      $region35: #{tpu_custom_call.1} parent=5 // pred_region
        // Predicated region
        $region37: #{tpu_custom_call.1} parent=35 // pred_check
          %p279 = pneg %p63
        $region38: #{tpu_custom_call.1} parent=35 // pred_check_branch
          %281 = sbr.rel (%p279) target = $region40
        $region39: #{tpu_custom_call.1} parent=35 // pred_region
          %s282 = sand.u32 %s53, 1
          %s283 = scalar_lea.sflag [#allocation4], %s282
          %s284 = sand.u32 %s53, 1
          %s285 = smul.addr %s284, 8
          %s286 = scalar_lea.vmem [#allocation3], %s285
          %s287 = sadd.s32 %s27, %s29
          %289 = vsyncadd %s283, 0
          %s290 = sadd.s32 %s287, %s28
          %s291 = smul.addr %s290, 8
          %s292 = scalar_lea.hbm %s0, %s291
          %s294 = sshll.u32 %s292, 4
          %s295 = int_to_ptr.hbm [resolvable:$true] %s294
          %s296 = sshll.u32 %s286, 4
          %s297 = int_to_ptr.vmem [resolvable:$true] %s296
          %299 = dma.hbm_to_vmem [thread:$0]  %s295, 128, %s297, %s283
        $region40: #{tpu_custom_call.1} parent=35 // pred_fallthru
          _
      $region36: #{tpu_custom_call.1} parent=5 // pred_fallthru
        _
      %p300 = scmp.le.s32.totalorder 1, %s20
      %p301 = scmp.lt.s32.totalorder %s20, 3
      %p302 = pnand %p300, %p301
      %p303 = pneg %p302
      // Predicated region
      $region41: #{tpu_custom_call.1} parent=5 // pred_check
        _
      $region42: #{tpu_custom_call.1} parent=5 // pred_check_branch
        %305 = sbr.rel (%p302) target = $region44
      $region43: #{tpu_custom_call.1} parent=5 // pred_region
        %s306 = ssub.s32 %s20, 1
        %s307 = sand.u32 %s56, 1
        %s308 = scalar_lea.sflag [#allocation4], %s307
        %s309 = sand.u32 %s56, 1
        %s310 = smul.addr %s309, 8
        %s311 = scalar_lea.vmem [#allocation3], %s310
        // Predicated region
        $region45: #{tpu_custom_call.1} parent=43 // pred_check
          %p312 = pneg %p69
        $region46: #{tpu_custom_call.1} parent=43 // pred_check_branch
          %314 = sbr.rel (%p312) target = $region48
        $region47: #{tpu_custom_call.1} parent=43 // pred_region
          %316 = dma.done %s308, 128
        $region48: #{tpu_custom_call.1} parent=43 // pred_fallthru
          _
        // Predicated region
        $region49: #{tpu_custom_call.1} parent=43 // pred_check
          %p317 = pneg %p95
        $region50: #{tpu_custom_call.1} parent=43 // pred_check_branch
          %319 = sbr.rel (%p317) target = $region52
        $region51: #{tpu_custom_call.1} parent=43 // pred_region
          %321 = dma.done [#allocation7], 2048
        $region52: #{tpu_custom_call.1} parent=43 // pred_fallthru
          _
        // Predicated region
        $region53: #{tpu_custom_call.1} parent=43 // pred_check
          %p322 = pneg %p116
        $region54: #{tpu_custom_call.1} parent=43 // pred_check_branch
          %324 = sbr.rel (%p322) target = $region56
        $region55: #{tpu_custom_call.1} parent=43 // pred_region
          %326 = dma.done [#allocation7], 2048
        $region56: #{tpu_custom_call.1} parent=43 // pred_fallthru
          _
        // Predicated region
        $region57: #{tpu_custom_call.1} parent=43 // pred_check
          %p327 = pneg %p158
        $region58: #{tpu_custom_call.1} parent=43 // pred_check_branch
          %329 = sbr.rel (%p327) target = $region60
        $region59: #{tpu_custom_call.1} parent=43 // pred_region
          %331 = dma.done [#allocation10], 4096
        $region60: #{tpu_custom_call.1} parent=43 // pred_fallthru
          _
        %s332 = sand.u32 %s56, 1
        %s333 = scalar_lea.sflag [#allocation4], %s332
        %s334 = sand.u32 %s56, 1
        %s335 = smul.addr %s334, 8
        %s336 = scalar_lea.vmem [#allocation3], %s335
        %p337 = pneg %p69
        %p338 = pneg %p66
        %p339 = pneg %p95
        %p340 = pneg %p92
        %p341 = pneg %p116
        %p342 = pneg %p113
        %p343 = pneg %p137
        %p344 = pneg %p134
        %p345 = pneg %p158
        %p346 = pneg %p155
        %p347 = pneg %p179
        %p348 = pneg %p176
        %p349 = pneg %p209
        %p350 = pneg %p206
        %s351 = sand.u32 %s196, 1
        %s352 = scalar_lea.sflag [#allocation5], %s351
        %s353 = sand.u32 %s196, 1
        %s354 = smul.addr %s353, 8
        %s355 = scalar_lea.vmem [#allocation11], %s354
        %s356 = sadd.s32 %s30, %s32
        %s357 = sadd.s32 %s30, %s32
        %p358 = scmp.eq.s32.totalorder %s32, 0
        // Predicated region
        $region61: #{tpu_custom_call.1} parent=43 // pred_check
          %p359 = pneg %p358
        $region62: #{tpu_custom_call.1} parent=43 // pred_check_branch
          %361 = sbr.rel (%p359) target = $region64
        $region63: #{tpu_custom_call.1} parent=43 // pred_region
          %v362 = vld [vmem:[#allocation6] sm:$0xff]
          %v363 = vld [vmem:[#allocation6 + $0x8] sm:$0xff]
          %v364 = vld [vmem:[#allocation6 + $0x10] sm:$0xff]
          %v365 = vld [vmem:[#allocation6 + $0x18] sm:$0xff]
          %v366 = vld [vmem:[#allocation6 + $0x20] sm:$0xff]
          %v367 = vld [vmem:[#allocation6 + $0x28] sm:$0xff]
          %v368 = vld [vmem:[#allocation6 + $0x30] sm:$0xff]
          %v369 = vld [vmem:[#allocation6 + $0x38] sm:$0xff]
          %v370 = vld [vmem:[#allocation6 + $0x40] sm:$0xff]
          %v371 = vld [vmem:[#allocation6 + $0x48] sm:$0xff]
          %v372 = vld [vmem:[#allocation6 + $0x50] sm:$0xff]
          %v373 = vld [vmem:[#allocation6 + $0x58] sm:$0xff]
          %v374 = vld [vmem:[#allocation6 + $0x60] sm:$0xff]
          %v375 = vld [vmem:[#allocation6 + $0x68] sm:$0xff]
          %v376 = vld [vmem:[#allocation6 + $0x70] sm:$0xff]
          %v377 = vld [vmem:[#allocation6 + $0x78] sm:$0xff]
          %v378 = vld [vmem:[#allocation9] sm:$0xff]
          %v379 = vld [vmem:[#allocation9 + $0x8] sm:$0xff]
          %v380 = vld [vmem:[#allocation9 + $0x10] sm:$0xff]
          %v381 = vld [vmem:[#allocation9 + $0x18] sm:$0xff]
          %v382 = vld [vmem:[#allocation9 + $0x20] sm:$0xff]
          %v383 = vld [vmem:[#allocation9 + $0x28] sm:$0xff]
          %v384 = vld [vmem:[#allocation9 + $0x30] sm:$0xff]
          %v385 = vld [vmem:[#allocation9 + $0x38] sm:$0xff]
          %v386 = vld [vmem:[#allocation9 + $0x40] sm:$0xff]
          %v387 = vld [vmem:[#allocation9 + $0x48] sm:$0xff]
          %v388 = vld [vmem:[#allocation9 + $0x50] sm:$0xff]
          %v389 = vld [vmem:[#allocation9 + $0x58] sm:$0xff]
          %v390 = vld [vmem:[#allocation9 + $0x60] sm:$0xff]
          %v391 = vld [vmem:[#allocation9 + $0x68] sm:$0xff]
          %v392 = vld [vmem:[#allocation9 + $0x70] sm:$0xff]
          %v393 = vld [vmem:[#allocation9 + $0x78] sm:$0xff]
          %v394 = vld [vmem:[#allocation9 + $0x80] sm:$0xff]
          %v395 = vld [vmem:[#allocation9 + $0x88] sm:$0xff]
          %v396 = vld [vmem:[#allocation9 + $0x90] sm:$0xff]
          %v397 = vld [vmem:[#allocation9 + $0x98] sm:$0xff]
          %v398 = vld [vmem:[#allocation9 + $0xa0] sm:$0xff]
          %v399 = vld [vmem:[#allocation9 + $0xa8] sm:$0xff]
          %v400 = vld [vmem:[#allocation9 + $0xb0] sm:$0xff]
          %v401 = vld [vmem:[#allocation9 + $0xb8] sm:$0xff]
          %v402 = vld [vmem:[#allocation9 + $0xc0] sm:$0xff]
          %v403 = vld [vmem:[#allocation9 + $0xc8] sm:$0xff]
          %v404 = vld [vmem:[#allocation9 + $0xd0] sm:$0xff]
          %v405 = vld [vmem:[#allocation9 + $0xd8] sm:$0xff]
          %v406 = vld [vmem:[#allocation9 + $0xe0] sm:$0xff]
          %v407 = vld [vmem:[#allocation9 + $0xe8] sm:$0xff]
          %v408 = vld [vmem:[#allocation9 + $0xf0] sm:$0xff]
          %v409 = vld [vmem:[#allocation9 + $0xf8] sm:$0xff]
          %v410 = vld [vmem:[%s5] sm:$0x3]
          %v412 = vperm.slane %v410, 0
          %v413 = vperm.slane %v410, 1
          %416 = vmatpush.msra.mxu0 %v408
          %417 = vmatpush.msra.mxu0 %v406
          %418 = vmatpush.msra.mxu0 %v404
          %419 = vmatpush.msra.mxu0 %v402
          %420 = vmatpush.msra.mxu0 %v400
          %421 = vmatpush.msra.mxu0 %v398
          %422 = vmatpush.msra.mxu0 %v396
          %423 = vmatpush.msra.mxu0 %v394
          %424 = vmatpush.msra.mxu0 %v392
          %425 = vmatpush.msra.mxu0 %v390
          %426 = vmatpush.msra.mxu0 %v388
          %427 = vmatpush.msra.mxu0 %v386
          %428 = vmatpush.msra.mxu0 %v384
          %429 = vmatpush.msra.mxu0 %v382
          %430 = vmatpush.msra.mxu0 %v380
          %431 = vmatpush.msra.mxu0 %v378
          %432 = vmatmul.f32.gmra.mxu0 %v362
          %v433 = vpop.f32.mrf.mxu0
          %v434 = vadd.f32 %v412, %v433
          %435 = vmatmul.f32.gmra.mxu0 %v363
          %v436 = vpop.f32.mrf.mxu0
          %v437 = vadd.f32 %v412, %v436
          %438 = vmatmul.f32.gmra.mxu0 %v364
          %v439 = vpop.f32.mrf.mxu0
          %v440 = vadd.f32 %v412, %v439
          %441 = vmatmul.f32.gmra.mxu0 %v365
          %v442 = vpop.f32.mrf.mxu0
          %v443 = vadd.f32 %v412, %v442
          %444 = vmatmul.f32.gmra.mxu0 %v366
          %v445 = vpop.f32.mrf.mxu0
          %v446 = vadd.f32 %v412, %v445
          %447 = vmatmul.f32.gmra.mxu0 %v367
          %v448 = vpop.f32.mrf.mxu0
          %v449 = vadd.f32 %v412, %v448
          %450 = vmatmul.f32.gmra.mxu0 %v368
          %v451 = vpop.f32.mrf.mxu0
          %v452 = vadd.f32 %v412, %v451
          %453 = vmatmul.f32.gmra.mxu0 %v369
          %v454 = vpop.f32.mrf.mxu0
          %v455 = vadd.f32 %v412, %v454
          %456 = vmatmul.f32.gmra.mxu0 %v370
          %v457 = vpop.f32.mrf.mxu0
          %v458 = vadd.f32 %v412, %v457
          %459 = vmatmul.f32.gmra.mxu0 %v371
          %v460 = vpop.f32.mrf.mxu0
          %v461 = vadd.f32 %v412, %v460
          %462 = vmatmul.f32.gmra.mxu0 %v372
          %v463 = vpop.f32.mrf.mxu0
          %v464 = vadd.f32 %v412, %v463
          %465 = vmatmul.f32.gmra.mxu0 %v373
          %v466 = vpop.f32.mrf.mxu0
          %v467 = vadd.f32 %v412, %v466
          %468 = vmatmul.f32.gmra.mxu0 %v374
          %v469 = vpop.f32.mrf.mxu0
          %v470 = vadd.f32 %v412, %v469
          %471 = vmatmul.f32.gmra.mxu0 %v375
          %v472 = vpop.f32.mrf.mxu0
          %v473 = vadd.f32 %v412, %v472
          %474 = vmatmul.f32.gmra.mxu0 %v376
          %v475 = vpop.f32.mrf.mxu0
          %v476 = vadd.f32 %v412, %v475
          %477 = vmatmul.f32.gmra.mxu0 %v377
          %v478 = vpop.f32.mrf.mxu0
          %v479 = vadd.f32 %v412, %v478
          %480 = vdwg.mxu0
          %481 = vmatpush.msra.mxu0 %v409
          %482 = vmatpush.msra.mxu0 %v407
          %483 = vmatpush.msra.mxu0 %v405
          %484 = vmatpush.msra.mxu0 %v403
          %485 = vmatpush.msra.mxu0 %v401
          %486 = vmatpush.msra.mxu0 %v399
          %487 = vmatpush.msra.mxu0 %v397
          %488 = vmatpush.msra.mxu0 %v395
          %489 = vmatpush.msra.mxu0 %v393
          %490 = vmatpush.msra.mxu0 %v391
          %491 = vmatpush.msra.mxu0 %v389
          %492 = vmatpush.msra.mxu0 %v387
          %493 = vmatpush.msra.mxu0 %v385
          %494 = vmatpush.msra.mxu0 %v383
          %495 = vmatpush.msra.mxu0 %v381
          %496 = vmatpush.msra.mxu0 %v379
          %497 = vmatmul.f32.gmra.mxu0 %v362
          %v498 = vpop.f32.mrf.mxu0
          %v499 = vadd.f32 %v413, %v498
          %500 = vmatmul.f32.gmra.mxu0 %v363
          %v501 = vpop.f32.mrf.mxu0
          %v502 = vadd.f32 %v413, %v501
          %503 = vmatmul.f32.gmra.mxu0 %v364
          %v504 = vpop.f32.mrf.mxu0
          %v505 = vadd.f32 %v413, %v504
          %506 = vmatmul.f32.gmra.mxu0 %v365
          %v507 = vpop.f32.mrf.mxu0
          %v508 = vadd.f32 %v413, %v507
          %509 = vmatmul.f32.gmra.mxu0 %v366
          %v510 = vpop.f32.mrf.mxu0
          %v511 = vadd.f32 %v413, %v510
          %512 = vmatmul.f32.gmra.mxu0 %v367
          %v513 = vpop.f32.mrf.mxu0
          %v514 = vadd.f32 %v413, %v513
          %515 = vmatmul.f32.gmra.mxu0 %v368
          %v516 = vpop.f32.mrf.mxu0
          %v517 = vadd.f32 %v413, %v516
          %518 = vmatmul.f32.gmra.mxu0 %v369
          %v519 = vpop.f32.mrf.mxu0
          %v520 = vadd.f32 %v413, %v519
          %521 = vmatmul.f32.gmra.mxu0 %v370
          %v522 = vpop.f32.mrf.mxu0
          %v523 = vadd.f32 %v413, %v522
          %524 = vmatmul.f32.gmra.mxu0 %v371
          %v525 = vpop.f32.mrf.mxu0
          %v526 = vadd.f32 %v413, %v525
          %527 = vmatmul.f32.gmra.mxu0 %v372
          %v528 = vpop.f32.mrf.mxu0
          %v529 = vadd.f32 %v413, %v528
          %530 = vmatmul.f32.gmra.mxu0 %v373
          %v531 = vpop.f32.mrf.mxu0
          %v532 = vadd.f32 %v413, %v531
          %533 = vmatmul.f32.gmra.mxu0 %v374
          %v534 = vpop.f32.mrf.mxu0
          %v535 = vadd.f32 %v413, %v534
          %536 = vmatmul.f32.gmra.mxu0 %v375
          %v537 = vpop.f32.mrf.mxu0
          %v538 = vadd.f32 %v413, %v537
          %539 = vmatmul.f32.gmra.mxu0 %v376
          %v540 = vpop.f32.mrf.mxu0
          %v541 = vadd.f32 %v413, %v540
          %542 = vmatmul.f32.gmra.mxu0 %v377
          %v543 = vpop.f32.mrf.mxu0
          %v544 = vadd.f32 %v413, %v543
          %545 = vdwg.mxu0
          %546 = vst [vmem:[#allocation2] sm:$0xff] %v434
          %547 = vst [vmem:[#allocation2 + $0x8] sm:$0xff] %v499
          %548 = vst [vmem:[#allocation2 + $0x10] sm:$0xff] %v437
          %549 = vst [vmem:[#allocation2 + $0x18] sm:$0xff] %v502
          %550 = vst [vmem:[#allocation2 + $0x20] sm:$0xff] %v440
          %551 = vst [vmem:[#allocation2 + $0x28] sm:$0xff] %v505
          %552 = vst [vmem:[#allocation2 + $0x30] sm:$0xff] %v443
          %553 = vst [vmem:[#allocation2 + $0x38] sm:$0xff] %v508
          %554 = vst [vmem:[#allocation2 + $0x40] sm:$0xff] %v446
          %555 = vst [vmem:[#allocation2 + $0x48] sm:$0xff] %v511
          %556 = vst [vmem:[#allocation2 + $0x50] sm:$0xff] %v449
          %557 = vst [vmem:[#allocation2 + $0x58] sm:$0xff] %v514
          %558 = vst [vmem:[#allocation2 + $0x60] sm:$0xff] %v452
          %559 = vst [vmem:[#allocation2 + $0x68] sm:$0xff] %v517
          %560 = vst [vmem:[#allocation2 + $0x70] sm:$0xff] %v455
          %561 = vst [vmem:[#allocation2 + $0x78] sm:$0xff] %v520
          %562 = vst [vmem:[#allocation2 + $0x80] sm:$0xff] %v458
          %563 = vst [vmem:[#allocation2 + $0x88] sm:$0xff] %v523
          %564 = vst [vmem:[#allocation2 + $0x90] sm:$0xff] %v461
          %565 = vst [vmem:[#allocation2 + $0x98] sm:$0xff] %v526
          %566 = vst [vmem:[#allocation2 + $0xa0] sm:$0xff] %v464
          %567 = vst [vmem:[#allocation2 + $0xa8] sm:$0xff] %v529
          %568 = vst [vmem:[#allocation2 + $0xb0] sm:$0xff] %v467
          %569 = vst [vmem:[#allocation2 + $0xb8] sm:$0xff] %v532
          %570 = vst [vmem:[#allocation2 + $0xc0] sm:$0xff] %v470
          %571 = vst [vmem:[#allocation2 + $0xc8] sm:$0xff] %v535
          %572 = vst [vmem:[#allocation2 + $0xd0] sm:$0xff] %v473
          %573 = vst [vmem:[#allocation2 + $0xd8] sm:$0xff] %v538
          %574 = vst [vmem:[#allocation2 + $0xe0] sm:$0xff] %v476
          %575 = vst [vmem:[#allocation2 + $0xe8] sm:$0xff] %v541
          %576 = vst [vmem:[#allocation2 + $0xf0] sm:$0xff] %v479
          %577 = vst [vmem:[#allocation2 + $0xf8] sm:$0xff] %v544
        $region64: #{tpu_custom_call.1} parent=43 // pred_fallthru
          _
        %v578 = vld [vmem:[%s311] sm:$0xff]
        %v579 = vld [vmem:[#allocation8] sm:$0xff]
        %v580 = vld [vmem:[#allocation8 + $0x8] sm:$0xff]
        %v581 = vld [vmem:[#allocation8 + $0x10] sm:$0xff]
        %v582 = vld [vmem:[#allocation8 + $0x18] sm:$0xff]
        %v583 = vld [vmem:[#allocation8 + $0x20] sm:$0xff]
        %v584 = vld [vmem:[#allocation8 + $0x28] sm:$0xff]
        %v585 = vld [vmem:[#allocation8 + $0x30] sm:$0xff]
        %v586 = vld [vmem:[#allocation8 + $0x38] sm:$0xff]
        %v587 = vld [vmem:[#allocation8 + $0x40] sm:$0xff]
        %v588 = vld [vmem:[#allocation8 + $0x48] sm:$0xff]
        %v589 = vld [vmem:[#allocation8 + $0x50] sm:$0xff]
        %v590 = vld [vmem:[#allocation8 + $0x58] sm:$0xff]
        %v591 = vld [vmem:[#allocation8 + $0x60] sm:$0xff]
        %v592 = vld [vmem:[#allocation8 + $0x68] sm:$0xff]
        %v593 = vld [vmem:[#allocation8 + $0x70] sm:$0xff]
        %v594 = vld [vmem:[#allocation8 + $0x78] sm:$0xff]
        %v595 = vld [vmem:[%s3] sm:$0x1]
        %v597 = vperm.slane %v595, 0
        %599 = vmatpush.msra.mxu0 %v594
        %600 = vmatpush.msra.mxu0 %v593
        %601 = vmatpush.msra.mxu0 %v592
        %602 = vmatpush.msra.mxu0 %v591
        %603 = vmatpush.msra.mxu0 %v590
        %604 = vmatpush.msra.mxu0 %v589
        %605 = vmatpush.msra.mxu0 %v588
        %606 = vmatpush.msra.mxu0 %v587
        %607 = vmatpush.msra.mxu0 %v586
        %608 = vmatpush.msra.mxu0 %v585
        %609 = vmatpush.msra.mxu0 %v584
        %610 = vmatpush.msra.mxu0 %v583
        %611 = vmatpush.msra.mxu0 %v582
        %612 = vmatpush.msra.mxu0 %v581
        %613 = vmatpush.msra.mxu0 %v580
        %614 = vmatpush.msra.mxu0 %v579
        %615 = vmatmul.f32.gmra.mxu0 %v578
        %v616 = vpop.f32.mrf.mxu0
        %v617 = vadd.f32 %v597, %v616
        %618 = vdwg.mxu0
        %v619 = vld [vmem:[#allocation2] sm:$0xff]
        %v620 = vld [vmem:[#allocation2 + $0x10] sm:$0xff]
        %v621 = vld [vmem:[#allocation2 + $0x20] sm:$0xff]
        %v622 = vld [vmem:[#allocation2 + $0x30] sm:$0xff]
        %v623 = vld [vmem:[#allocation2 + $0x40] sm:$0xff]
        %v624 = vld [vmem:[#allocation2 + $0x50] sm:$0xff]
        %v625 = vld [vmem:[#allocation2 + $0x60] sm:$0xff]
        %v626 = vld [vmem:[#allocation2 + $0x70] sm:$0xff]
        %v627 = vld [vmem:[#allocation2 + $0x80] sm:$0xff]
        %v628 = vld [vmem:[#allocation2 + $0x90] sm:$0xff]
        %v629 = vld [vmem:[#allocation2 + $0xa0] sm:$0xff]
        %v630 = vld [vmem:[#allocation2 + $0xb0] sm:$0xff]
        %v631 = vld [vmem:[#allocation2 + $0xc0] sm:$0xff]
        %v632 = vld [vmem:[#allocation2 + $0xd0] sm:$0xff]
        %v633 = vld [vmem:[#allocation2 + $0xe0] sm:$0xff]
        %v634 = vld [vmem:[#allocation2 + $0xf0] sm:$0xff]
        %v635 = vld [vmem:[#allocation2 + $0x8] sm:$0xff]
        %v636 = vld [vmem:[#allocation2 + $0x18] sm:$0xff]
        %v637 = vld [vmem:[#allocation2 + $0x28] sm:$0xff]
        %v638 = vld [vmem:[#allocation2 + $0x38] sm:$0xff]
        %v639 = vld [vmem:[#allocation2 + $0x48] sm:$0xff]
        %v640 = vld [vmem:[#allocation2 + $0x58] sm:$0xff]
        %v641 = vld [vmem:[#allocation2 + $0x68] sm:$0xff]
        %v642 = vld [vmem:[#allocation2 + $0x78] sm:$0xff]
        %v643 = vld [vmem:[#allocation2 + $0x88] sm:$0xff]
        %v644 = vld [vmem:[#allocation2 + $0x98] sm:$0xff]
        %v645 = vld [vmem:[#allocation2 + $0xa8] sm:$0xff]
        %v646 = vld [vmem:[#allocation2 + $0xb8] sm:$0xff]
        %v647 = vld [vmem:[#allocation2 + $0xc8] sm:$0xff]
        %v648 = vld [vmem:[#allocation2 + $0xd8] sm:$0xff]
        %v649 = vld [vmem:[#allocation2 + $0xe8] sm:$0xff]
        %v650 = vld [vmem:[#allocation2 + $0xf8] sm:$0xff]
        %651 = vmatpush.xpose.msra.mxu0 %v634
        %652 = vmatpush.xpose.msra.mxu0 %v633
        %653 = vmatpush.xpose.msra.mxu0 %v632
        %654 = vmatpush.xpose.msra.mxu0 %v631
        %655 = vmatpush.xpose.msra.mxu0 %v630
        %656 = vmatpush.xpose.msra.mxu0 %v629
        %657 = vmatpush.xpose.msra.mxu0 %v628
        %658 = vmatpush.xpose.msra.mxu0 %v627
        %659 = vmatpush.xpose.msra.mxu0 %v626
        %660 = vmatpush.xpose.msra.mxu0 %v625
        %661 = vmatpush.xpose.msra.mxu0 %v624
        %662 = vmatpush.xpose.msra.mxu0 %v623
        %663 = vmatpush.xpose.msra.mxu0 %v622
        %664 = vmatpush.xpose.msra.mxu0 %v621
        %665 = vmatpush.xpose.msra.mxu0 %v620
        %666 = vmatpush.xpose.msra.mxu0 %v619
        %667 = vmatmul.f32.gmra.mxu0 %v617
        %v668 = vpop.f32.mrf.mxu0
        %v669 = vadd.f32 0.0, %v668
        %670 = vdwg.mxu0
        %v671 = vlaneseq
        %v672 = vand.u32 %v671, 127
        %vm673 = vcmp.lt.s32.totalorder %v672, 8
        %v674 = vsel %vm673, %v669, -inf
        %675 = vmax.xlane.f32.xlu0 %v674
        %v676 = vpop.xlane.xlu0 %675
        %v677 = vsub.f32 %v674, %v676
        %v678 = vmul.f32 %v677, 1.442695
        %v679 = vpow.pop %v678
        %680 = vadd.xlane.f32.xlu0 %v679
        %v681 = vpop.xlane.xlu0 %680
        %v682 = vrcp.pop %v681
        %v683 = vmul.f32 %v679, %v682
        %684 = vmatpush.msra.mxu0 %v650
        %685 = vmatpush.msra.mxu0 %v649
        %686 = vmatpush.msra.mxu0 %v648
        %687 = vmatpush.msra.mxu0 %v647
        %688 = vmatpush.msra.mxu0 %v646
        %689 = vmatpush.msra.mxu0 %v645
        %690 = vmatpush.msra.mxu0 %v644
        %691 = vmatpush.msra.mxu0 %v643
        %692 = vmatpush.msra.mxu0 %v642
        %693 = vmatpush.msra.mxu0 %v641
        %694 = vmatpush.msra.mxu0 %v640
        %695 = vmatpush.msra.mxu0 %v639
        %696 = vmatpush.msra.mxu0 %v638
        %697 = vmatpush.msra.mxu0 %v637
        %698 = vmatpush.msra.mxu0 %v636
        %699 = vmatpush.msra.mxu0 %v635
        %700 = vmatmul.f32.gmra.mxu0 %v683
        %v701 = vpop.f32.mrf.mxu0
        %v702 = vadd.f32 0.0, %v701
        %703 = vdwg.mxu0
        %704 = vst [vmem:[%s355] sm:$0xff] %v702
        %s705 = sand.u32 %s196, 1
        %s706 = scalar_lea.sflag [#allocation5], %s705
        %s707 = sand.u32 %s196, 1
        %s708 = smul.addr %s707, 8
        %s709 = scalar_lea.vmem [#allocation11], %s708
        // Predicated region
        $region65: #{tpu_custom_call.1} parent=43 // pred_check
          %p710 = pneg %p206
        $region66: #{tpu_custom_call.1} parent=43 // pred_check_branch
          %712 = sbr.rel (%p710) target = $region68
        $region67: #{tpu_custom_call.1} parent=43 // pred_region
          %s713 = sadd.s32 %s30, %s32
          %715 = vsyncadd %s706, 0
          %s716 = sadd.s32 %s713, %s31
          %s717 = smul.addr %s716, 8
          %s718 = scalar_lea.hbm %s6, %s717
          %s720 = sshll.u32 %s709, 4
          %s721 = int_to_ptr.vmem [resolvable:$true] %s720
          %s722 = sshll.u32 %s718, 4
          %s723 = int_to_ptr.hbm [resolvable:$true] %s722
          %725 = dma.vmem_to_hbm [thread:$0]  %s721, 128, %s723, %s706
        $region68: #{tpu_custom_call.1} parent=43 // pred_fallthru
          _
      $region44: #{tpu_custom_call.1} parent=5 // pred_fallthru
        _
      %p726 = scmp.le.s32.totalorder 2, %s20
      // Predicated region
      $region69: #{tpu_custom_call.1} parent=5 // pred_check
        %p727 = pneg %p726
      $region70: #{tpu_custom_call.1} parent=5 // pred_check_branch
        %729 = sbr.rel (%p727) target = $region72
      $region71: #{tpu_custom_call.1} parent=5 // pred_region
        %s730 = ssub.s32 %s20, 2
        // Predicated region
        $region73: #{tpu_custom_call.1} parent=71 // pred_check
          %p731 = pneg %p212
        $region74: #{tpu_custom_call.1} parent=71 // pred_check_branch
          %733 = sbr.rel (%p731) target = $region76
        $region75: #{tpu_custom_call.1} parent=71 // pred_region
          %s734 = sand.u32 %s197, 1
          %s735 = scalar_lea.sflag [#allocation5], %s734
          %s736 = sand.u32 %s197, 1
          %s737 = smul.addr %s736, 8
          %s738 = scalar_lea.vmem [#allocation11], %s737
          %740 = dma.done %s735, 128
        $region76: #{tpu_custom_call.1} parent=71 // pred_fallthru
          _
      $region72: #{tpu_custom_call.1} parent=5 // pred_fallthru
        _
    $region6: #{tpu_custom_call.1} parent=1 // loop_footer
      %s24 = sadd.s32 1, %s20
    $region7: #{tpu_custom_call.1} parent=1 // loop_footer_branch
      %19 = sbr.rel target = $region3
    $region8: #{tpu_custom_call.1} parent=1 // loop_exit
      _
    %741 = vsyncpa [#allocation4], 1
    %s742 = scalar_lea.sflag [#allocation4], 1
    %743 = vsyncpa %s742, 1
    %744 = vsyncpa [#allocation7], 1
    %745 = vsyncpa [#allocation10], 1
    %746 = vsyncpa [#allocation5], 1
    %s747 = scalar_lea.sflag [#allocation5], 1
    %748 = vsyncpa %s747, 1

</llo_original>
